<compile_context>
chip_gen: v6e
topology: v6e:2x2x1
jax: 0.10.0
libtpu: 0.0.40
codegen_flags: <defaults>
</compile_context>

<pallas_src>
import functools

import jax
import jax.numpy as jnp
from jax.experimental import pallas as pl
from jax.experimental.pallas import tpu as pltpu


def _local_variance_kernel(x_ref, o_ref, *, patch_size: int, H: int, W: int):
    """x_ref: (Nb, Hp, Wp) reflect-padded planes ; o_ref: (Nb, H, W) variance."""
    P = patch_size
    inv_n = 1.0 / float(P * P)

    x = x_ref[...].astype(jnp.float32)        # (Nb, Hp, Wp)
    xx = x * x

    # --- separable window sums --------------------------------------------
    # Lane (width) direction: Wp -> W
    s1 = x[:, :, 0:W]
    s2 = xx[:, :, 0:W]
    for dj in range(1, P):
        s1 = s1 + x[:, :, dj:dj + W]
        s2 = s2 + xx[:, :, dj:dj + W]

    # Sublane (height) direction: Hp -> H
    t1 = s1[:, 0:H, :]
    t2 = s2[:, 0:H, :]
    for di in range(1, P):
        t1 = t1 + s1[:, di:di + H, :]
        t2 = t2 + s2[:, di:di + H, :]

    mean = t1 * inv_n
    var = t2 * inv_n - mean * mean
    # Clamp tiny negative values from E[x^2] - mean^2 cancellation.
    o_ref[...] = jnp.maximum(var, 0.0).astype(o_ref.dtype)


def image_local_variance(image: jax.Array, patch_size: int = 5) -> jax.Array:
    """JAX/Pallas equivalent of the PyTorch `image_local_variance`.

    image: [B, C, H, W] float array -> [B, C, H, W] local variance.
    """
    B, C, H, W = image.shape
    pad = patch_size // 2
    # Reflect padding (wrapper glue; same semantics as F.pad(..., 'reflect')).
    # TODO(synk): fold the reflect pad into the kernel to halve HBM input traffic.
    x = jnp.pad(image, ((0, 0), (0, 0), (pad, pad), (pad, pad)), mode="reflect")
    Hp, Wp = H + 2 * pad, W + 2 * pad
    N = B * C
    x = x.reshape(N, Hp, Wp)

    # ---- choose how many planes to process per grid step ------------------
    # Rough per-plane working set (f32): double-buffered in/out + x, xx,
    # s1, s2 + output-sized temps.
    per_plane_bytes = 4 * (4 * Hp * Wp + 2 * Hp * W + 4 * H * W)
    budget_bytes = 16 * 1024 * 1024          # conservative across v5e/v6e/v7x
    nb = max(1, budget_bytes // per_plane_bytes)
    # Keep the grid at >= 2 steps when there is more than one plane so the
    # two v7x TensorCores both get work ("parallel" plane axis).
    if N > 1:
        nb = min(nb, -(-N // 2))
    nb = int(min(nb, N))
    # TODO(synk): spatially tile (with PxP halos) planes too large for VMEM.

    # Pad plane count up to a multiple of nb (extra planes are discarded).
    n_pad = -(-N // nb) * nb
    if n_pad != N:
        x = jnp.pad(x, ((0, n_pad - N), (0, 0), (0, 0)))

    kernel = functools.partial(
        _local_variance_kernel, patch_size=patch_size, H=H, W=W)

    out = pl.pallas_call(
        kernel,
        out_shape=jax.ShapeDtypeStruct((n_pad, H, W), image.dtype),
        grid_spec=pltpu.PrefetchScalarGridSpec(
            num_scalar_prefetch=0,
            grid=(n_pad // nb,),
            in_specs=[pl.BlockSpec((nb, Hp, Wp), lambda i: (i, 0, 0))],
            out_specs=pl.BlockSpec((nb, H, W), lambda i: (i, 0, 0)),
        ),
        compiler_params=pltpu.CompilerParams(
            dimension_semantics=("parallel",),
            vmem_limit_bytes=48 * 1024 * 1024,
        ),
    )(x)

    return out[:N].reshape(B, C, H, W)


class ImageLocalVariance:
    """Stateless module mirroring the PyTorch nn.Module (no parameters)."""

    def __init__(self, patch_size: int = 5):
        self.patch_size = patch_size

    def __call__(self, image: jax.Array) -> jax.Array:
        return image_local_variance(image, self.patch_size)


def _reference(image: jax.Array, patch_size: int = 5) -> jax.Array:
    # Pure-JAX reference matching the torch formula exactly (two-pass).
    pad = patch_size // 2
    x = jnp.pad(image, ((0, 0), (0, 0), (pad, pad), (pad, pad)), mode="reflect")
    B, C, H, W = image.shape
    patches = jnp.stack(
        [x[:, :, di:di + H, dj:dj + W]
         for di in range(patch_size) for dj in range(patch_size)], axis=-1)
    mean = patches.mean(-1, keepdims=True)
    return ((patches - mean) ** 2).mean(-1)


if __name__ == "__main__":
    key = jax.random.PRNGKey(0)
    x = jax.random.uniform(key, (2, 4, 16, 16), dtype=jnp.float32)

    module = ImageLocalVariance(patch_size=5)
    out = module(x)
    out = jax.block_until_ready(out)

    ref = _reference(x, 5)
    assert out.shape == (2, 4, 16, 16)
    assert jnp.allclose(out, ref, atol=1e-5, rtol=1e-5), (
        float(jnp.max(jnp.abs(out - ref))))
    print("KERNEL_OK")
</pallas_src>

<mosaic_0001>
module attributes {stable_mosaic.version = 11 : i64} {
  func.func @_local_variance_kernel(%arg0: i32, %arg1: memref<4x20x20xf32, #tpu.memory_space<vmem>>, %arg2: memref<4x16x16xf32, #tpu.memory_space<vmem>>) attributes {dimension_semantics = [#tpu.dimension_semantics<parallel>], iteration_bounds = array<i64: 2>, scalar_prefetch = 0 : i64, scratch_operands = 0 : i64, tpu.core_type = #tpu.core_type<tc>, window_params = [{transform_indices = @transform_0, window_bounds = array<i64: 4, 20, 20>}, {transform_indices = @transform_1, window_bounds = array<i64: 4, 16, 16>}]} {
    %c0 = arith.constant 0 : index
    %c0_0 = arith.constant 0 : index
    %c0_1 = arith.constant 0 : index
    %0 = vector.load %arg1[%c0, %c0_0, %c0_1] : memref<4x20x20xf32, #tpu.memory_space<vmem>>, vector<4x20x20xf32>
    %1 = arith.mulf %0, %0 : vector<4x20x20xf32>
    %2 = vector.extract_strided_slice %0 {offsets = [0, 0, 0], sizes = [4, 20, 16], strides = [1, 1, 1]} : vector<4x20x20xf32> to vector<4x20x16xf32>
    %3 = vector.extract_strided_slice %1 {offsets = [0, 0, 0], sizes = [4, 20, 16], strides = [1, 1, 1]} : vector<4x20x20xf32> to vector<4x20x16xf32>
    %4 = vector.extract_strided_slice %0 {offsets = [0, 0, 1], sizes = [4, 20, 16], strides = [1, 1, 1]} : vector<4x20x20xf32> to vector<4x20x16xf32>
    %5 = arith.addf %2, %4 : vector<4x20x16xf32>
    %6 = vector.extract_strided_slice %1 {offsets = [0, 0, 1], sizes = [4, 20, 16], strides = [1, 1, 1]} : vector<4x20x20xf32> to vector<4x20x16xf32>
    %7 = arith.addf %3, %6 : vector<4x20x16xf32>
    %8 = vector.extract_strided_slice %0 {offsets = [0, 0, 2], sizes = [4, 20, 16], strides = [1, 1, 1]} : vector<4x20x20xf32> to vector<4x20x16xf32>
    %9 = arith.addf %5, %8 : vector<4x20x16xf32>
    %10 = vector.extract_strided_slice %1 {offsets = [0, 0, 2], sizes = [4, 20, 16], strides = [1, 1, 1]} : vector<4x20x20xf32> to vector<4x20x16xf32>
    %11 = arith.addf %7, %10 : vector<4x20x16xf32>
    %12 = vector.extract_strided_slice %0 {offsets = [0, 0, 3], sizes = [4, 20, 16], strides = [1, 1, 1]} : vector<4x20x20xf32> to vector<4x20x16xf32>
    %13 = arith.addf %9, %12 : vector<4x20x16xf32>
    %14 = vector.extract_strided_slice %1 {offsets = [0, 0, 3], sizes = [4, 20, 16], strides = [1, 1, 1]} : vector<4x20x20xf32> to vector<4x20x16xf32>
    %15 = arith.addf %11, %14 : vector<4x20x16xf32>
    %16 = vector.extract_strided_slice %0 {offsets = [0, 0, 4], sizes = [4, 20, 16], strides = [1, 1, 1]} : vector<4x20x20xf32> to vector<4x20x16xf32>
    %17 = arith.addf %13, %16 : vector<4x20x16xf32>
    %18 = vector.extract_strided_slice %1 {offsets = [0, 0, 4], sizes = [4, 20, 16], strides = [1, 1, 1]} : vector<4x20x20xf32> to vector<4x20x16xf32>
    %19 = arith.addf %15, %18 : vector<4x20x16xf32>
    %20 = vector.extract_strided_slice %17 {offsets = [0, 0, 0], sizes = [4, 16, 16], strides = [1, 1, 1]} : vector<4x20x16xf32> to vector<4x16x16xf32>
    %21 = vector.extract_strided_slice %19 {offsets = [0, 0, 0], sizes = [4, 16, 16], strides = [1, 1, 1]} : vector<4x20x16xf32> to vector<4x16x16xf32>
    %22 = vector.extract_strided_slice %17 {offsets = [0, 1, 0], sizes = [4, 16, 16], strides = [1, 1, 1]} : vector<4x20x16xf32> to vector<4x16x16xf32>
    %23 = arith.addf %20, %22 : vector<4x16x16xf32>
    %24 = vector.extract_strided_slice %19 {offsets = [0, 1, 0], sizes = [4, 16, 16], strides = [1, 1, 1]} : vector<4x20x16xf32> to vector<4x16x16xf32>
    %25 = arith.addf %21, %24 : vector<4x16x16xf32>
    %26 = vector.extract_strided_slice %17 {offsets = [0, 2, 0], sizes = [4, 16, 16], strides = [1, 1, 1]} : vector<4x20x16xf32> to vector<4x16x16xf32>
    %27 = arith.addf %23, %26 : vector<4x16x16xf32>
    %28 = vector.extract_strided_slice %19 {offsets = [0, 2, 0], sizes = [4, 16, 16], strides = [1, 1, 1]} : vector<4x20x16xf32> to vector<4x16x16xf32>
    %29 = arith.addf %25, %28 : vector<4x16x16xf32>
    %30 = vector.extract_strided_slice %17 {offsets = [0, 3, 0], sizes = [4, 16, 16], strides = [1, 1, 1]} : vector<4x20x16xf32> to vector<4x16x16xf32>
    %31 = arith.addf %27, %30 : vector<4x16x16xf32>
    %32 = vector.extract_strided_slice %19 {offsets = [0, 3, 0], sizes = [4, 16, 16], strides = [1, 1, 1]} : vector<4x20x16xf32> to vector<4x16x16xf32>
    %33 = arith.addf %29, %32 : vector<4x16x16xf32>
    %34 = vector.extract_strided_slice %17 {offsets = [0, 4, 0], sizes = [4, 16, 16], strides = [1, 1, 1]} : vector<4x20x16xf32> to vector<4x16x16xf32>
    %35 = arith.addf %31, %34 : vector<4x16x16xf32>
    %36 = vector.extract_strided_slice %19 {offsets = [0, 4, 0], sizes = [4, 16, 16], strides = [1, 1, 1]} : vector<4x20x16xf32> to vector<4x16x16xf32>
    %37 = arith.addf %33, %36 : vector<4x16x16xf32>
    %cst = arith.constant 4.000000e-02 : f32
    %38 = vector.broadcast %cst : f32 to vector<4x16x16xf32>
    %39 = arith.mulf %35, %38 : vector<4x16x16xf32>
    %cst_2 = arith.constant 4.000000e-02 : f32
    %40 = vector.broadcast %cst_2 : f32 to vector<4x16x16xf32>
    %41 = arith.mulf %37, %40 : vector<4x16x16xf32>
    %42 = arith.mulf %39, %39 : vector<4x16x16xf32>
    %43 = arith.subf %41, %42 : vector<4x16x16xf32>
    %cst_3 = arith.constant 0.000000e+00 : f32
    %44 = vector.broadcast %cst_3 : f32 to vector<4x16x16xf32>
    %45 = arith.maximumf %43, %44 : vector<4x16x16xf32>
    %c0_4 = arith.constant 0 : index
    %c0_5 = arith.constant 0 : index
    %c0_6 = arith.constant 0 : index
    %46 = vector.load %arg2[%c0_4, %c0_5, %c0_6] : memref<4x16x16xf32, #tpu.memory_space<vmem>>, vector<4x16x16xf32>
    tpu.vector_store %arg2[%c0_4, %c0_5, %c0_6], %45 {strides = array<i32>} : memref<4x16x16xf32, #tpu.memory_space<vmem>>, vector<4x16x16xf32>,
    return
  }
  func.func @transform_0(%arg0: i32) -> (i32, i32, i32) {
    %c0_i32 = arith.constant 0 : i32
    %c0_i32_0 = arith.constant 0 : i32
    %c0_i32_1 = arith.constant 0 : i32
    return %arg0, %c0_i32, %c0_i32_0 : i32, i32, i32
  }
  func.func @transform_1(%arg0: i32) -> (i32, i32, i32) {
    %c0_i32 = arith.constant 0 : i32
    %c0_i32_0 = arith.constant 0 : i32
    %c0_i32_1 = arith.constant 0 : i32
    return %arg0, %c0_i32, %c0_i32_0 : i32, i32, i32
  }
}

</mosaic_0001>

<llo_original>
// kernel: tpu_custom_call.1
$region0: #{tpu_custom_call.1}
  #allocation0 [shape = 'u32[]', space=smem, size = 0x4, offset = 0x4, fixed_abs, tag = 'smem constant byte address 0x4 - core index']
  #allocation1 [shape = 'u32[144,128]{1,0:T(1,128)}', space=vmem, size = 0x12000, scoped, tag = 'internal scratch']
  %s0 = inlined_call_operand.vmem [shape: f32[8,20,20], index: 0, kind: input, shape index: {}]
  %s1 = inlined_call_operand.hbm [shape: f32[8,16,16], index: 1, kind: output, shape index: {}]
  %s2 = sld [smem:[#allocation0]]
  $region37: #{tpu_custom_call.1} parent=0
    _
  %s4 = ssub.s32 1, %s2
  %s5 = scalar_select 0, %s4, %s2
  $region1: #{tpu_custom_call.1} parent=0
    #allocation2 [shape = 'u8[65536]{0}', space=vmem, size = 0x10000, scoped, tag = 'output window, operand 0']
    #allocation3 [shape = 's32[2]{0}', space=sflag, size = 0x8, scoped, tag = 'scoped memory for tpu_custom_call.1']
    %6 = vsyncpa [#allocation3], 0
    %s7 = scalar_lea.sflag [#allocation3], 1
    %8 = vsyncpa %s7, 0
    loop: start=0, step=1, limit=4
    $region2: #{tpu_custom_call.1} parent=1 // loop_pre_header
      _
    $region3: #{tpu_custom_call.1} parent=1 // loop_header
      %s10 = sphi 0, %s14
      %p11 = scmp.ge.s32.totalorder %s10, 4
      %s20 = sphi 0, %s22
      %s23 = sphi 0, %s20
      %s24 = sphi 0, %s23
      %s40 = sphi 0, %s24
      %s46 = sphi 0, %s48
      %s49 = sphi 0, %s46
      %s50 = sphi 0, %s49
      %s66 = sphi 0, %s50
    $region4: #{tpu_custom_call.1} parent=1 // loop_header_branch
      %13 = sbr.rel (%p11) target = $region8
    $region5: #{tpu_custom_call.1} parent=1 // loop_body
      %s15 = ssub.s32 %s10, 1
      %s16 = ssub.s32 %s10, 2
      %s17 = sadd.s32 %s10, 1
      %s18 = ssub.s32 %s10, %s17
      %p19 = scmp.eq.s32.totalorder %s18, 0
      %s21 = sadd.s32 %s20, 1
      %s22 = scalar_select %p19, %s20, %s21
      %p25 = pneg %p19
      %p26 = scmp.eq.s32.totalorder %s10, 1
      %p27 = por %p25, %p26
      %p28 = scmp.ne.s32.totalorder %s20, %s23
      %p29 = scmp.eq.s32.totalorder %s10, 0
      %p30 = por %p28, %p29
      %p31 = scmp.ne.s32.totalorder %s20, %s23
      %p32 = scmp.eq.s32.totalorder %s15, 1
      %p33 = por %p31, %p32
      %p34 = scmp.ne.s32.totalorder %s23, %s24
      %p35 = scmp.eq.s32.totalorder %s15, 0
      %p36 = por %p34, %p35
      %p37 = scmp.ne.s32.totalorder %s23, %s24
      %p38 = scmp.eq.s32.totalorder %s16, 1
      %p39 = por %p37, %p38
      %p41 = scmp.ne.s32.totalorder %s24, %s40
      %p42 = scmp.eq.s32.totalorder %s16, 0
      %p43 = por %p41, %p42
      %s44 = ssub.s32 %s10, %s17
      %p45 = scmp.eq.s32.totalorder %s44, 0
      %s47 = sadd.s32 %s46, 1
      %s48 = scalar_select %p45, %s46, %s47
      %p51 = pneg %p45
      %p52 = scmp.eq.s32.totalorder %s10, 1
      %p53 = por %p51, %p52
      %p54 = scmp.ne.s32.totalorder %s46, %s49
      %p55 = scmp.eq.s32.totalorder %s10, 0
      %p56 = por %p54, %p55
      %p57 = scmp.ne.s32.totalorder %s46, %s49
      %p58 = scmp.eq.s32.totalorder %s15, 1
      %p59 = por %p57, %p58
      %p60 = scmp.ne.s32.totalorder %s49, %s50
      %p61 = scmp.eq.s32.totalorder %s15, 0
      %p62 = por %p60, %p61
      %p63 = scmp.ne.s32.totalorder %s49, %s50
      %p64 = scmp.eq.s32.totalorder %s16, 1
      %p65 = por %p63, %p64
      %p67 = scmp.ne.s32.totalorder %s50, %s66
      %p68 = scmp.eq.s32.totalorder %s16, 0
      %p69 = por %p67, %p68
      %p70 = scmp.le.s32.totalorder 1, %s10
      %p71 = scmp.lt.s32.totalorder %s10, 3
      %p72 = pnand %p70, %p71
      %p73 = pneg %p72
      // Predicated region
      $region9: #{tpu_custom_call.1} parent=5 // pred_check
        _
      $region10: #{tpu_custom_call.1} parent=5 // pred_check_branch
        %75 = sbr.rel (%p72) target = $region12
      $region11: #{tpu_custom_call.1} parent=5 // pred_region
        %s76 = ssub.s32 %s10, 1
      $region12: #{tpu_custom_call.1} parent=5 // pred_fallthru
        _
      %p77 = scmp.lt.s32.totalorder %s10, 2
      // Predicated region
      $region13: #{tpu_custom_call.1} parent=5 // pred_check
        %p78 = pneg %p77
      $region14: #{tpu_custom_call.1} parent=5 // pred_check_branch
        %80 = sbr.rel (%p78) target = $region16
      $region15: #{tpu_custom_call.1} parent=5 // pred_region
        // Predicated region
        $region17: #{tpu_custom_call.1} parent=15 // pred_check
          %p81 = pneg %p30
        $region18: #{tpu_custom_call.1} parent=15 // pred_check_branch
          %83 = sbr.rel (%p81) target = $region20
        $region19: #{tpu_custom_call.1} parent=15 // pred_region
          %s84 = smul.u32 4, %s10
          %p85 = scmp.lt.s32.totalorder %s84, 7
          %s86 = scalar_select %p85, %s84, 7
          %s87 = smul.addr %s86, 3
          %s88 = smul.addr %s87, 8
          %s89 = scalar_lea.vmem %s0, %s88
          %s90 = smul.u32 4, %s10
        $region20: #{tpu_custom_call.1} parent=15 // pred_fallthru
          _
      $region16: #{tpu_custom_call.1} parent=5 // pred_fallthru
        _
      %p91 = scmp.le.s32.totalorder 1, %s10
      %p92 = scmp.lt.s32.totalorder %s10, 3
      %p93 = pnand %p91, %p92
      %p94 = pneg %p93
      // Predicated region
      $region21: #{tpu_custom_call.1} parent=5 // pred_check
        _
      $region22: #{tpu_custom_call.1} parent=5 // pred_check_branch
        %96 = sbr.rel (%p93) target = $region24
      $region23: #{tpu_custom_call.1} parent=5 // pred_region
        %s97 = ssub.s32 %s10, 1
        %s98 = smul.u32 4, %s15
        %p99 = scmp.lt.s32.totalorder %s98, 7
        %s100 = scalar_select %p99, %s98, 7
        %s101 = smul.addr %s100, 3
        %s102 = smul.addr %s101, 8
        %s103 = scalar_lea.vmem %s0, %s102
        %p104 = pneg %p36
        %p105 = pneg %p33
        %p106 = pneg %p62
        %p107 = pneg %p59
        %s108 = sand.u32 %s49, 1
        %s109 = scalar_lea.sflag [#allocation3], %s108
        %s110 = sand.u32 %s49, 1
        %s111 = smul.addr %s110, 64
        %s112 = scalar_lea.vmem [#allocation2], %s111
        %s113 = smul.u32 4, %s15
        %p114 = scmp.lt.s32.totalorder %s113, 7
        %s115 = scalar_select %p114, %s113, 7
        %s116 = smul.addr %s115, 3
        %s117 = smul.addr %s116, 8
        %s118 = scalar_lea.vmem %s0, %s117
        %s119 = smul.u32 4, %s15
        %s120 = smul.u32 4, %s15
        %v121 = vld [vmem:[%s118] sm:$0xff]
        %v122 = vld [vmem:[%s118 + $0x8] sm:$0xff]
        %v123 = vld [vmem:[%s118 + $0x10] sm:$0xf]
        %v124 = vld [vmem:[%s118 + $0x18] sm:$0xff]
        %v125 = vld [vmem:[%s118 + $0x20] sm:$0xff]
        %v126 = vld [vmem:[%s118 + $0x28] sm:$0xf]
        %v127 = vld [vmem:[%s118 + $0x30] sm:$0xff]
        %v128 = vld [vmem:[%s118 + $0x38] sm:$0xff]
        %v129 = vld [vmem:[%s118 + $0x40] sm:$0xf]
        %v130 = vld [vmem:[%s118 + $0x48] sm:$0xff]
        %v131 = vld [vmem:[%s118 + $0x50] sm:$0xff]
        %v132 = vld [vmem:[%s118 + $0x58] sm:$0xf]
        %v133 = vmul.f32 %v121, %v121
        %v134 = vmul.f32 %v122, %v122
        %v135 = vmul.f32 %v123, %v123
        %v136 = vmul.f32 %v124, %v124
        %v137 = vmul.f32 %v125, %v125
        %v138 = vmul.f32 %v126, %v126
        %v139 = vmul.f32 %v127, %v127
        %v140 = vmul.f32 %v128, %v128
        %v141 = vmul.f32 %v129, %v129
        %v142 = vmul.f32 %v130, %v130
        %v143 = vmul.f32 %v131, %v131
        %v144 = vmul.f32 %v132, %v132
        %157 = vrot.lane.b32.xlu0 %v121, 127
        %v158 = vpop.permute.xlu0 %157
        %159 = vrot.lane.b32.xlu0 %v122, 127
        %v160 = vpop.permute.xlu0 %159
        %161 = vrot.lane.b32.xlu0 %v123, 127
        %v162 = vpop.permute.xlu0 %161
        %163 = vrot.lane.b32.xlu0 %v124, 127
        %v164 = vpop.permute.xlu0 %163
        %165 = vrot.lane.b32.xlu0 %v125, 127
        %v166 = vpop.permute.xlu0 %165
        %167 = vrot.lane.b32.xlu0 %v126, 127
        %v168 = vpop.permute.xlu0 %167
        %169 = vrot.lane.b32.xlu0 %v127, 127
        %v170 = vpop.permute.xlu0 %169
        %171 = vrot.lane.b32.xlu0 %v128, 127
        %v172 = vpop.permute.xlu0 %171
        %173 = vrot.lane.b32.xlu0 %v129, 127
        %v174 = vpop.permute.xlu0 %173
        %175 = vrot.lane.b32.xlu0 %v130, 127
        %v176 = vpop.permute.xlu0 %175
        %177 = vrot.lane.b32.xlu0 %v131, 127
        %v178 = vpop.permute.xlu0 %177
        %179 = vrot.lane.b32.xlu0 %v132, 127
        %v180 = vpop.permute.xlu0 %179
        %v193 = vadd.f32 %v121, %v158
        %v194 = vadd.f32 %v122, %v160
        %v195 = vadd.f32 %v123, %v162
        %v196 = vadd.f32 %v124, %v164
        %v197 = vadd.f32 %v125, %v166
        %v198 = vadd.f32 %v126, %v168
        %v199 = vadd.f32 %v127, %v170
        %v200 = vadd.f32 %v128, %v172
        %v201 = vadd.f32 %v129, %v174
        %v202 = vadd.f32 %v130, %v176
        %v203 = vadd.f32 %v131, %v178
        %v204 = vadd.f32 %v132, %v180
        %217 = vrot.lane.b32.xlu0 %v133, 127
        %v218 = vpop.permute.xlu0 %217
        %219 = vrot.lane.b32.xlu0 %v134, 127
        %v220 = vpop.permute.xlu0 %219
        %221 = vrot.lane.b32.xlu0 %v135, 127
        %v222 = vpop.permute.xlu0 %221
        %223 = vrot.lane.b32.xlu0 %v136, 127
        %v224 = vpop.permute.xlu0 %223
        %225 = vrot.lane.b32.xlu0 %v137, 127
        %v226 = vpop.permute.xlu0 %225
        %227 = vrot.lane.b32.xlu0 %v138, 127
        %v228 = vpop.permute.xlu0 %227
        %229 = vrot.lane.b32.xlu0 %v139, 127
        %v230 = vpop.permute.xlu0 %229
        %231 = vrot.lane.b32.xlu0 %v140, 127
        %v232 = vpop.permute.xlu0 %231
        %233 = vrot.lane.b32.xlu0 %v141, 127
        %v234 = vpop.permute.xlu0 %233
        %235 = vrot.lane.b32.xlu0 %v142, 127
        %v236 = vpop.permute.xlu0 %235
        %237 = vrot.lane.b32.xlu0 %v143, 127
        %v238 = vpop.permute.xlu0 %237
        %239 = vrot.lane.b32.xlu0 %v144, 127
        %v240 = vpop.permute.xlu0 %239
        %v253 = vadd.f32 %v133, %v218
        %v254 = vadd.f32 %v134, %v220
        %v255 = vadd.f32 %v135, %v222
        %v256 = vadd.f32 %v136, %v224
        %v257 = vadd.f32 %v137, %v226
        %v258 = vadd.f32 %v138, %v228
        %v259 = vadd.f32 %v139, %v230
        %v260 = vadd.f32 %v140, %v232
        %v261 = vadd.f32 %v141, %v234
        %v262 = vadd.f32 %v142, %v236
        %v263 = vadd.f32 %v143, %v238
        %v264 = vadd.f32 %v144, %v240
        %265 = vrot.lane.b32.xlu0 %v121, 126
        %v266 = vpop.permute.xlu0 %265
        %267 = vrot.lane.b32.xlu0 %v122, 126
        %v268 = vpop.permute.xlu0 %267
        %269 = vrot.lane.b32.xlu0 %v123, 126
        %v270 = vpop.permute.xlu0 %269
        %271 = vrot.lane.b32.xlu0 %v124, 126
        %v272 = vpop.permute.xlu0 %271
        %273 = vrot.lane.b32.xlu0 %v125, 126
        %v274 = vpop.permute.xlu0 %273
        %275 = vrot.lane.b32.xlu0 %v126, 126
        %v276 = vpop.permute.xlu0 %275
        %277 = vrot.lane.b32.xlu0 %v127, 126
        %v278 = vpop.permute.xlu0 %277
        %279 = vrot.lane.b32.xlu0 %v128, 126
        %v280 = vpop.permute.xlu0 %279
        %281 = vrot.lane.b32.xlu0 %v129, 126
        %v282 = vpop.permute.xlu0 %281
        %283 = vrot.lane.b32.xlu0 %v130, 126
        %v284 = vpop.permute.xlu0 %283
        %285 = vrot.lane.b32.xlu0 %v131, 126
        %v286 = vpop.permute.xlu0 %285
        %287 = vrot.lane.b32.xlu0 %v132, 126
        %v288 = vpop.permute.xlu0 %287
        %v301 = vadd.f32 %v193, %v266
        %v302 = vadd.f32 %v194, %v268
        %v303 = vadd.f32 %v195, %v270
        %v304 = vadd.f32 %v196, %v272
        %v305 = vadd.f32 %v197, %v274
        %v306 = vadd.f32 %v198, %v276
        %v307 = vadd.f32 %v199, %v278
        %v308 = vadd.f32 %v200, %v280
        %v309 = vadd.f32 %v201, %v282
        %v310 = vadd.f32 %v202, %v284
        %v311 = vadd.f32 %v203, %v286
        %v312 = vadd.f32 %v204, %v288
        %313 = vrot.lane.b32.xlu0 %v133, 126
        %v314 = vpop.permute.xlu0 %313
        %315 = vrot.lane.b32.xlu0 %v134, 126
        %v316 = vpop.permute.xlu0 %315
        %317 = vrot.lane.b32.xlu0 %v135, 126
        %v318 = vpop.permute.xlu0 %317
        %319 = vrot.lane.b32.xlu0 %v136, 126
        %v320 = vpop.permute.xlu0 %319
        %321 = vrot.lane.b32.xlu0 %v137, 126
        %v322 = vpop.permute.xlu0 %321
        %323 = vrot.lane.b32.xlu0 %v138, 126
        %v324 = vpop.permute.xlu0 %323
        %325 = vrot.lane.b32.xlu0 %v139, 126
        %v326 = vpop.permute.xlu0 %325
        %327 = vrot.lane.b32.xlu0 %v140, 126
        %v328 = vpop.permute.xlu0 %327
        %329 = vrot.lane.b32.xlu0 %v141, 126
        %v330 = vpop.permute.xlu0 %329
        %331 = vrot.lane.b32.xlu0 %v142, 126
        %v332 = vpop.permute.xlu0 %331
        %333 = vrot.lane.b32.xlu0 %v143, 126
        %v334 = vpop.permute.xlu0 %333
        %335 = vrot.lane.b32.xlu0 %v144, 126
        %v336 = vpop.permute.xlu0 %335
        %v349 = vadd.f32 %v253, %v314
        %v350 = vadd.f32 %v254, %v316
        %v351 = vadd.f32 %v255, %v318
        %v352 = vadd.f32 %v256, %v320
        %v353 = vadd.f32 %v257, %v322
        %v354 = vadd.f32 %v258, %v324
        %v355 = vadd.f32 %v259, %v326
        %v356 = vadd.f32 %v260, %v328
        %v357 = vadd.f32 %v261, %v330
        %v358 = vadd.f32 %v262, %v332
        %v359 = vadd.f32 %v263, %v334
        %v360 = vadd.f32 %v264, %v336
        %361 = vrot.lane.b32.xlu0 %v121, 125
        %v362 = vpop.permute.xlu0 %361
        %363 = vrot.lane.b32.xlu0 %v122, 125
        %v364 = vpop.permute.xlu0 %363
        %365 = vrot.lane.b32.xlu0 %v123, 125
        %v366 = vpop.permute.xlu0 %365
        %367 = vrot.lane.b32.xlu0 %v124, 125
        %v368 = vpop.permute.xlu0 %367
        %369 = vrot.lane.b32.xlu0 %v125, 125
        %v370 = vpop.permute.xlu0 %369
        %371 = vrot.lane.b32.xlu0 %v126, 125
        %v372 = vpop.permute.xlu0 %371
        %373 = vrot.lane.b32.xlu0 %v127, 125
        %v374 = vpop.permute.xlu0 %373
        %375 = vrot.lane.b32.xlu0 %v128, 125
        %v376 = vpop.permute.xlu0 %375
        %377 = vrot.lane.b32.xlu0 %v129, 125
        %v378 = vpop.permute.xlu0 %377
        %379 = vrot.lane.b32.xlu0 %v130, 125
        %v380 = vpop.permute.xlu0 %379
        %381 = vrot.lane.b32.xlu0 %v131, 125
        %v382 = vpop.permute.xlu0 %381
        %383 = vrot.lane.b32.xlu0 %v132, 125
        %v384 = vpop.permute.xlu0 %383
        %v397 = vadd.f32 %v301, %v362
        %v398 = vadd.f32 %v302, %v364
        %v399 = vadd.f32 %v303, %v366
        %v400 = vadd.f32 %v304, %v368
        %v401 = vadd.f32 %v305, %v370
        %v402 = vadd.f32 %v306, %v372
        %v403 = vadd.f32 %v307, %v374
        %v404 = vadd.f32 %v308, %v376
        %v405 = vadd.f32 %v309, %v378
        %v406 = vadd.f32 %v310, %v380
        %v407 = vadd.f32 %v311, %v382
        %v408 = vadd.f32 %v312, %v384
        %409 = vrot.lane.b32.xlu0 %v133, 125
        %v410 = vpop.permute.xlu0 %409
        %411 = vrot.lane.b32.xlu0 %v134, 125
        %v412 = vpop.permute.xlu0 %411
        %413 = vrot.lane.b32.xlu0 %v135, 125
        %v414 = vpop.permute.xlu0 %413
        %415 = vrot.lane.b32.xlu0 %v136, 125
        %v416 = vpop.permute.xlu0 %415
        %417 = vrot.lane.b32.xlu0 %v137, 125
        %v418 = vpop.permute.xlu0 %417
        %419 = vrot.lane.b32.xlu0 %v138, 125
        %v420 = vpop.permute.xlu0 %419
        %421 = vrot.lane.b32.xlu0 %v139, 125
        %v422 = vpop.permute.xlu0 %421
        %423 = vrot.lane.b32.xlu0 %v140, 125
        %v424 = vpop.permute.xlu0 %423
        %425 = vrot.lane.b32.xlu0 %v141, 125
        %v426 = vpop.permute.xlu0 %425
        %427 = vrot.lane.b32.xlu0 %v142, 125
        %v428 = vpop.permute.xlu0 %427
        %429 = vrot.lane.b32.xlu0 %v143, 125
        %v430 = vpop.permute.xlu0 %429
        %431 = vrot.lane.b32.xlu0 %v144, 125
        %v432 = vpop.permute.xlu0 %431
        %v445 = vadd.f32 %v349, %v410
        %v446 = vadd.f32 %v350, %v412
        %v447 = vadd.f32 %v351, %v414
        %v448 = vadd.f32 %v352, %v416
        %v449 = vadd.f32 %v353, %v418
        %v450 = vadd.f32 %v354, %v420
        %v451 = vadd.f32 %v355, %v422
        %v452 = vadd.f32 %v356, %v424
        %v453 = vadd.f32 %v357, %v426
        %v454 = vadd.f32 %v358, %v428
        %v455 = vadd.f32 %v359, %v430
        %v456 = vadd.f32 %v360, %v432
        %457 = vrot.lane.b32.xlu0 %v121, 124
        %v458 = vpop.permute.xlu0 %457
        %459 = vrot.lane.b32.xlu0 %v122, 124
        %v460 = vpop.permute.xlu0 %459
        %461 = vrot.lane.b32.xlu0 %v123, 124
        %v462 = vpop.permute.xlu0 %461
        %463 = vrot.lane.b32.xlu0 %v124, 124
        %v464 = vpop.permute.xlu0 %463
        %465 = vrot.lane.b32.xlu0 %v125, 124
        %v466 = vpop.permute.xlu0 %465
        %467 = vrot.lane.b32.xlu0 %v126, 124
        %v468 = vpop.permute.xlu0 %467
        %469 = vrot.lane.b32.xlu0 %v127, 124
        %v470 = vpop.permute.xlu0 %469
        %471 = vrot.lane.b32.xlu0 %v128, 124
        %v472 = vpop.permute.xlu0 %471
        %473 = vrot.lane.b32.xlu0 %v129, 124
        %v474 = vpop.permute.xlu0 %473
        %475 = vrot.lane.b32.xlu0 %v130, 124
        %v476 = vpop.permute.xlu0 %475
        %477 = vrot.lane.b32.xlu0 %v131, 124
        %v478 = vpop.permute.xlu0 %477
        %479 = vrot.lane.b32.xlu0 %v132, 124
        %v480 = vpop.permute.xlu0 %479
        %v493 = vadd.f32 %v397, %v458
        %v494 = vadd.f32 %v398, %v460
        %v495 = vadd.f32 %v399, %v462
        %v496 = vadd.f32 %v400, %v464
        %v497 = vadd.f32 %v401, %v466
        %v498 = vadd.f32 %v402, %v468
        %v499 = vadd.f32 %v403, %v470
        %v500 = vadd.f32 %v404, %v472
        %v501 = vadd.f32 %v405, %v474
        %v502 = vadd.f32 %v406, %v476
        %v503 = vadd.f32 %v407, %v478
        %v504 = vadd.f32 %v408, %v480
        %505 = vrot.lane.b32.xlu0 %v133, 124
        %v506 = vpop.permute.xlu0 %505
        %507 = vrot.lane.b32.xlu0 %v134, 124
        %v508 = vpop.permute.xlu0 %507
        %509 = vrot.lane.b32.xlu0 %v135, 124
        %v510 = vpop.permute.xlu0 %509
        %511 = vrot.lane.b32.xlu0 %v136, 124
        %v512 = vpop.permute.xlu0 %511
        %513 = vrot.lane.b32.xlu0 %v137, 124
        %v514 = vpop.permute.xlu0 %513
        %515 = vrot.lane.b32.xlu0 %v138, 124
        %v516 = vpop.permute.xlu0 %515
        %517 = vrot.lane.b32.xlu0 %v139, 124
        %v518 = vpop.permute.xlu0 %517
        %519 = vrot.lane.b32.xlu0 %v140, 124
        %v520 = vpop.permute.xlu0 %519
        %521 = vrot.lane.b32.xlu0 %v141, 124
        %v522 = vpop.permute.xlu0 %521
        %523 = vrot.lane.b32.xlu0 %v142, 124
        %v524 = vpop.permute.xlu0 %523
        %525 = vrot.lane.b32.xlu0 %v143, 124
        %v526 = vpop.permute.xlu0 %525
        %527 = vrot.lane.b32.xlu0 %v144, 124
        %v528 = vpop.permute.xlu0 %527
        %v541 = vadd.f32 %v445, %v506
        %v542 = vadd.f32 %v446, %v508
        %v543 = vadd.f32 %v447, %v510
        %v544 = vadd.f32 %v448, %v512
        %v545 = vadd.f32 %v449, %v514
        %v546 = vadd.f32 %v450, %v516
        %v547 = vadd.f32 %v451, %v518
        %v548 = vadd.f32 %v452, %v520
        %v549 = vadd.f32 %v453, %v522
        %v550 = vadd.f32 %v454, %v524
        %v551 = vadd.f32 %v455, %v526
        %v552 = vadd.f32 %v456, %v528
        %vm565 = vcmask 1046528
        %v566 = vrot.slane %v493, 1
        %v567 = vrot.slane %v494, 1
        %v568 = vsel %vm565, %v566, %v567
        %v569 = vrot.slane %v495, 1
        %v570 = vsel %vm565, %v567, %v569
        %v571 = vrot.slane %v496, 1
        %v572 = vrot.slane %v497, 1
        %v573 = vsel %vm565, %v571, %v572
        %v574 = vrot.slane %v498, 1
        %v575 = vsel %vm565, %v572, %v574
        %v576 = vrot.slane %v499, 1
        %v577 = vrot.slane %v500, 1
        %v578 = vsel %vm565, %v576, %v577
        %v579 = vrot.slane %v501, 1
        %v580 = vsel %vm565, %v577, %v579
        %v581 = vrot.slane %v502, 1
        %v582 = vrot.slane %v503, 1
        %v583 = vsel %vm565, %v581, %v582
        %v584 = vrot.slane %v504, 1
        %v585 = vsel %vm565, %v582, %v584
        %v594 = vadd.f32 %v493, %v568
        %v595 = vadd.f32 %v494, %v570
        %v596 = vadd.f32 %v496, %v573
        %v597 = vadd.f32 %v497, %v575
        %v598 = vadd.f32 %v499, %v578
        %v599 = vadd.f32 %v500, %v580
        %v600 = vadd.f32 %v502, %v583
        %v601 = vadd.f32 %v503, %v585
        %v614 = vrot.slane %v541, 1
        %v615 = vrot.slane %v542, 1
        %v616 = vsel %vm565, %v614, %v615
        %v617 = vrot.slane %v543, 1
        %v618 = vsel %vm565, %v615, %v617
        %v619 = vrot.slane %v544, 1
        %v620 = vrot.slane %v545, 1
        %v621 = vsel %vm565, %v619, %v620
        %v622 = vrot.slane %v546, 1
        %v623 = vsel %vm565, %v620, %v622
        %v624 = vrot.slane %v547, 1
        %v625 = vrot.slane %v548, 1
        %v626 = vsel %vm565, %v624, %v625
        %v627 = vrot.slane %v549, 1
        %v628 = vsel %vm565, %v625, %v627
        %v629 = vrot.slane %v550, 1
        %v630 = vrot.slane %v551, 1
        %v631 = vsel %vm565, %v629, %v630
        %v632 = vrot.slane %v552, 1
        %v633 = vsel %vm565, %v630, %v632
        %v642 = vadd.f32 %v541, %v616
        %v643 = vadd.f32 %v542, %v618
        %v644 = vadd.f32 %v544, %v621
        %v645 = vadd.f32 %v545, %v623
        %v646 = vadd.f32 %v547, %v626
        %v647 = vadd.f32 %v548, %v628
        %v648 = vadd.f32 %v550, %v631
        %v649 = vadd.f32 %v551, %v633
        %vm650 = vcmask 1045504
        %v651 = vrot.slane %v493, 2
        %v652 = vrot.slane %v494, 2
        %v653 = vsel %vm650, %v651, %v652
        %v654 = vrot.slane %v495, 2
        %v655 = vsel %vm650, %v652, %v654
        %v656 = vrot.slane %v496, 2
        %v657 = vrot.slane %v497, 2
        %v658 = vsel %vm650, %v656, %v657
        %v659 = vrot.slane %v498, 2
        %v660 = vsel %vm650, %v657, %v659
        %v661 = vrot.slane %v499, 2
        %v662 = vrot.slane %v500, 2
        %v663 = vsel %vm650, %v661, %v662
        %v664 = vrot.slane %v501, 2
        %v665 = vsel %vm650, %v662, %v664
        %v666 = vrot.slane %v502, 2
        %v667 = vrot.slane %v503, 2
        %v668 = vsel %vm650, %v666, %v667
        %v669 = vrot.slane %v504, 2
        %v670 = vsel %vm650, %v667, %v669
        %v679 = vadd.f32 %v594, %v653
        %v680 = vadd.f32 %v595, %v655
        %v681 = vadd.f32 %v596, %v658
        %v682 = vadd.f32 %v597, %v660
        %v683 = vadd.f32 %v598, %v663
        %v684 = vadd.f32 %v599, %v665
        %v685 = vadd.f32 %v600, %v668
        %v686 = vadd.f32 %v601, %v670
        %v687 = vrot.slane %v541, 2
        %v688 = vrot.slane %v542, 2
        %v689 = vsel %vm650, %v687, %v688
        %v690 = vrot.slane %v543, 2
        %v691 = vsel %vm650, %v688, %v690
        %v692 = vrot.slane %v544, 2
        %v693 = vrot.slane %v545, 2
        %v694 = vsel %vm650, %v692, %v693
        %v695 = vrot.slane %v546, 2
        %v696 = vsel %vm650, %v693, %v695
        %v697 = vrot.slane %v547, 2
        %v698 = vrot.slane %v548, 2
        %v699 = vsel %vm650, %v697, %v698
        %v700 = vrot.slane %v549, 2
        %v701 = vsel %vm650, %v698, %v700
        %v702 = vrot.slane %v550, 2
        %v703 = vrot.slane %v551, 2
        %v704 = vsel %vm650, %v702, %v703
        %v705 = vrot.slane %v552, 2
        %v706 = vsel %vm650, %v703, %v705
        %v715 = vadd.f32 %v642, %v689
        %v716 = vadd.f32 %v643, %v691
        %v717 = vadd.f32 %v644, %v694
        %v718 = vadd.f32 %v645, %v696
        %v719 = vadd.f32 %v646, %v699
        %v720 = vadd.f32 %v647, %v701
        %v721 = vadd.f32 %v648, %v704
        %v722 = vadd.f32 %v649, %v706
        %vm723 = vcmask 1044480
        %v724 = vrot.slane %v493, 3
        %v725 = vrot.slane %v494, 3
        %v726 = vsel %vm723, %v724, %v725
        %v727 = vrot.slane %v495, 3
        %v728 = vsel %vm723, %v725, %v727
        %v729 = vrot.slane %v496, 3
        %v730 = vrot.slane %v497, 3
        %v731 = vsel %vm723, %v729, %v730
        %v732 = vrot.slane %v498, 3
        %v733 = vsel %vm723, %v730, %v732
        %v734 = vrot.slane %v499, 3
        %v735 = vrot.slane %v500, 3
        %v736 = vsel %vm723, %v734, %v735
        %v737 = vrot.slane %v501, 3
        %v738 = vsel %vm723, %v735, %v737
        %v739 = vrot.slane %v502, 3
        %v740 = vrot.slane %v503, 3
        %v741 = vsel %vm723, %v739, %v740
        %v742 = vrot.slane %v504, 3
        %v743 = vsel %vm723, %v740, %v742
        %v752 = vadd.f32 %v679, %v726
        %v753 = vadd.f32 %v680, %v728
        %v754 = vadd.f32 %v681, %v731
        %v755 = vadd.f32 %v682, %v733
        %v756 = vadd.f32 %v683, %v736
        %v757 = vadd.f32 %v684, %v738
        %v758 = vadd.f32 %v685, %v741
        %v759 = vadd.f32 %v686, %v743
        %v760 = vrot.slane %v541, 3
        %v761 = vrot.slane %v542, 3
        %v762 = vsel %vm723, %v760, %v761
        %v763 = vrot.slane %v543, 3
        %v764 = vsel %vm723, %v761, %v763
        %v765 = vrot.slane %v544, 3
        %v766 = vrot.slane %v545, 3
        %v767 = vsel %vm723, %v765, %v766
        %v768 = vrot.slane %v546, 3
        %v769 = vsel %vm723, %v766, %v768
        %v770 = vrot.slane %v547, 3
        %v771 = vrot.slane %v548, 3
        %v772 = vsel %vm723, %v770, %v771
        %v773 = vrot.slane %v549, 3
        %v774 = vsel %vm723, %v771, %v773
        %v775 = vrot.slane %v550, 3
        %v776 = vrot.slane %v551, 3
        %v777 = vsel %vm723, %v775, %v776
        %v778 = vrot.slane %v552, 3
        %v779 = vsel %vm723, %v776, %v778
        %v788 = vadd.f32 %v715, %v762
        %v789 = vadd.f32 %v716, %v764
        %v790 = vadd.f32 %v717, %v767
        %v791 = vadd.f32 %v718, %v769
        %v792 = vadd.f32 %v719, %v772
        %v793 = vadd.f32 %v720, %v774
        %v794 = vadd.f32 %v721, %v777
        %v795 = vadd.f32 %v722, %v779
        %vm796 = vcmask 1043456
        %v797 = vrot.slane %v493, 4
        %v798 = vrot.slane %v494, 4
        %v799 = vsel %vm796, %v797, %v798
        %v800 = vrot.slane %v495, 4
        %v801 = vsel %vm796, %v798, %v800
        %v802 = vrot.slane %v496, 4
        %v803 = vrot.slane %v497, 4
        %v804 = vsel %vm796, %v802, %v803
        %v805 = vrot.slane %v498, 4
        %v806 = vsel %vm796, %v803, %v805
        %v807 = vrot.slane %v499, 4
        %v808 = vrot.slane %v500, 4
        %v809 = vsel %vm796, %v807, %v808
        %v810 = vrot.slane %v501, 4
        %v811 = vsel %vm796, %v808, %v810
        %v812 = vrot.slane %v502, 4
        %v813 = vrot.slane %v503, 4
        %v814 = vsel %vm796, %v812, %v813
        %v815 = vrot.slane %v504, 4
        %v816 = vsel %vm796, %v813, %v815
        %v825 = vadd.f32 %v752, %v799
        %v826 = vadd.f32 %v753, %v801
        %v827 = vadd.f32 %v754, %v804
        %v828 = vadd.f32 %v755, %v806
        %v829 = vadd.f32 %v756, %v809
        %v830 = vadd.f32 %v757, %v811
        %v831 = vadd.f32 %v758, %v814
        %v832 = vadd.f32 %v759, %v816
        %v833 = vrot.slane %v541, 4
        %v834 = vrot.slane %v542, 4
        %v835 = vsel %vm796, %v833, %v834
        %v836 = vrot.slane %v543, 4
        %v837 = vsel %vm796, %v834, %v836
        %v838 = vrot.slane %v544, 4
        %v839 = vrot.slane %v545, 4
        %v840 = vsel %vm796, %v838, %v839
        %v841 = vrot.slane %v546, 4
        %v842 = vsel %vm796, %v839, %v841
        %v843 = vrot.slane %v547, 4
        %v844 = vrot.slane %v548, 4
        %v845 = vsel %vm796, %v843, %v844
        %v846 = vrot.slane %v549, 4
        %v847 = vsel %vm796, %v844, %v846
        %v848 = vrot.slane %v550, 4
        %v849 = vrot.slane %v551, 4
        %v850 = vsel %vm796, %v848, %v849
        %v851 = vrot.slane %v552, 4
        %v852 = vsel %vm796, %v849, %v851
        %v861 = vadd.f32 %v788, %v835
        %v862 = vadd.f32 %v789, %v837
        %v863 = vadd.f32 %v790, %v840
        %v864 = vadd.f32 %v791, %v842
        %v865 = vadd.f32 %v792, %v845
        %v866 = vadd.f32 %v793, %v847
        %v867 = vadd.f32 %v794, %v850
        %v868 = vadd.f32 %v795, %v852
        %v869 = vmul.f32 %v825, 0.04
        %v870 = vmul.f32 %v826, 0.04
        %v871 = vmul.f32 %v827, 0.04
        %v872 = vmul.f32 %v828, 0.04
        %v873 = vmul.f32 %v829, 0.04
        %v874 = vmul.f32 %v830, 0.04
        %v875 = vmul.f32 %v831, 0.04
        %v876 = vmul.f32 %v832, 0.04
        %v877 = vmul.f32 %v861, 0.04
        %v878 = vmul.f32 %v862, 0.04
        %v879 = vmul.f32 %v863, 0.04
        %v880 = vmul.f32 %v864, 0.04
        %v881 = vmul.f32 %v865, 0.04
        %v882 = vmul.f32 %v866, 0.04
        %v883 = vmul.f32 %v867, 0.04
        %v884 = vmul.f32 %v868, 0.04
        %v885 = vmul.f32 %v869, %v869
        %v886 = vmul.f32 %v870, %v870
        %v887 = vmul.f32 %v871, %v871
        %v888 = vmul.f32 %v872, %v872
        %v889 = vmul.f32 %v873, %v873
        %v890 = vmul.f32 %v874, %v874
        %v891 = vmul.f32 %v875, %v875
        %v892 = vmul.f32 %v876, %v876
        %v893 = vsub.f32 %v877, %v885
        %v894 = vsub.f32 %v878, %v886
        %v895 = vsub.f32 %v879, %v887
        %v896 = vsub.f32 %v880, %v888
        %v897 = vsub.f32 %v881, %v889
        %v898 = vsub.f32 %v882, %v890
        %v899 = vsub.f32 %v883, %v891
        %v900 = vsub.f32 %v884, %v892
        %v901 = vmax.f32 %v893, 0.0
        %v902 = vmax.f32 %v894, 0.0
        %v903 = vmax.f32 %v895, 0.0
        %v904 = vmax.f32 %v896, 0.0
        %v905 = vmax.f32 %v897, 0.0
        %v906 = vmax.f32 %v898, 0.0
        %v907 = vmax.f32 %v899, 0.0
        %v908 = vmax.f32 %v900, 0.0
        %vm909 = vcmask 130048
        %910 = vst.msk [vmem:[%s112] sm:$0xff] %vm909, %v901
        %911 = vst.msk [vmem:[%s112 + $0x8] sm:$0xff] %vm909, %v902
        %912 = vst.msk [vmem:[%s112 + $0x10] sm:$0xff] %vm909, %v903
        %913 = vst.msk [vmem:[%s112 + $0x18] sm:$0xff] %vm909, %v904
        %914 = vst.msk [vmem:[%s112 + $0x20] sm:$0xff] %vm909, %v905
        %915 = vst.msk [vmem:[%s112 + $0x28] sm:$0xff] %vm909, %v906
        %916 = vst.msk [vmem:[%s112 + $0x30] sm:$0xff] %vm909, %v907
        %917 = vst.msk [vmem:[%s112 + $0x38] sm:$0xff] %vm909, %v908
        %s918 = sand.u32 %s49, 1
        %s919 = scalar_lea.sflag [#allocation3], %s918
        %s920 = sand.u32 %s49, 1
        %s921 = smul.addr %s920, 64
        %s922 = scalar_lea.vmem [#allocation2], %s921
        // Predicated region
        $region25: #{tpu_custom_call.1} parent=23 // pred_check
          %p923 = pneg %p59
        $region26: #{tpu_custom_call.1} parent=23 // pred_check_branch
          %925 = sbr.rel (%p923) target = $region28
        $region27: #{tpu_custom_call.1} parent=23 // pred_region
          %s926 = smul.u32 4, %s15
          %s928 = ssub.s32 1024, 1024
          %929 = vsyncadd %s919, %s928
          %s930 = smul.addr %s926, 2
          %s931 = smul.addr %s930, 128
          %s932 = scalar_lea.hbm %s1, %s931
          %s933 = sshll.u32 %s922, 4
          %s934 = int_to_ptr.vmem [resolvable:$true] %s933
          %939 = dma.vmem_to_hbm [thread:$0]  %s934, 1024, %s932, %s919, 128, 128, 8
        $region28: #{tpu_custom_call.1} parent=23 // pred_fallthru
          _
      $region24: #{tpu_custom_call.1} parent=5 // pred_fallthru
        _
      %p940 = scmp.le.s32.totalorder 2, %s10
      // Predicated region
      $region29: #{tpu_custom_call.1} parent=5 // pred_check
        %p941 = pneg %p940
      $region30: #{tpu_custom_call.1} parent=5 // pred_check_branch
        %943 = sbr.rel (%p941) target = $region32
      $region31: #{tpu_custom_call.1} parent=5 // pred_region
        %s944 = ssub.s32 %s10, 2
        // Predicated region
        $region33: #{tpu_custom_call.1} parent=31 // pred_check
          %p945 = pneg %p65
        $region34: #{tpu_custom_call.1} parent=31 // pred_check_branch
          %947 = sbr.rel (%p945) target = $region36
        $region35: #{tpu_custom_call.1} parent=31 // pred_region
          %s948 = sand.u32 %s50, 1
          %s949 = scalar_lea.sflag [#allocation3], %s948
          %s950 = sand.u32 %s50, 1
          %s951 = smul.addr %s950, 64
          %s952 = scalar_lea.vmem [#allocation2], %s951
          %953 = dma.done %s949, 1024
        $region36: #{tpu_custom_call.1} parent=31 // pred_fallthru
          _
      $region32: #{tpu_custom_call.1} parent=5 // pred_fallthru
        _
    $region6: #{tpu_custom_call.1} parent=1 // loop_footer
      %s14 = sadd.s32 1, %s10
    $region7: #{tpu_custom_call.1} parent=1 // loop_footer_branch
      %9 = sbr.rel target = $region3
    $region8: #{tpu_custom_call.1} parent=1 // loop_exit
      _
    %954 = vsyncpa [#allocation3], 1
    %s955 = scalar_lea.sflag [#allocation3], 1
    %956 = vsyncpa %s955, 1

</llo_original>
